<compile_context>
chip_gen: v7x
topology: tpu7x:2x2x1
jax: 0.10.0
libtpu: 0.0.40
codegen_flags: <defaults>
</compile_context>

<pallas_src>
import functools
import math

import jax
import jax.numpy as jnp
from jax.experimental import pallas as pl
from jax.experimental.pallas import tpu as pltpu


_LANE = 128  # vreg lane width


def _round_up(x: int, m: int) -> int:
    return ((x + m - 1) // m) * m


def _largest_divisor_tile(total: int, cap: int) -> int:
    """Largest multiple of 128 that divides `total` and is <= cap (total % 128 == 0)."""
    t = (min(cap, total) // _LANE) * _LANE
    while t > _LANE and total % t != 0:
        t -= _LANE
    return max(t, _LANE)


def _device_config():
    """Per-generation tile defaults + physical VMEM capacity."""
    kind = ""
    try:
        kind = jax.devices()[0].device_kind.lower()
    except Exception:  # pragma: no cover
        pass
    vmem_cap = 64 << 20  # conservative default (v7x per-TensorCore VMEM)
    try:
        vmem_cap = int(getattr(pltpu.get_tpu_info(), "vmem_capacity_bytes", vmem_cap))
    except Exception:  # pragma: no cover
        pass

    if ("v5 lite" in kind) or ("v5e" in kind) or ("v5litepod" in kind):
        # 128x128 MXU, 16 MiB default scoped VMEM -> small tiles.
        return dict(tile_m=128, tile_n=128, tile_k=256, whole_k_max=512, vmem_cap=vmem_cap)
    if "v6" in kind:
        # 256-wide MXU, 128 MiB VMEM -> larger K residency.
        return dict(tile_m=256, tile_n=256, tile_k=512, whole_k_max=1024, vmem_cap=vmem_cap)
    if ("v7" in kind) or vmem_cap <= (64 << 20):
        # v7x: 64 MiB VMEM but 3.2 TB/s HBM -> smaller re-streamed K slabs are cheap.
        return dict(tile_m=256, tile_n=256, tile_k=256, whole_k_max=512, vmem_cap=vmem_cap)
    # Unknown generation: v6e-like but conservative K residency.
    return dict(tile_m=256, tile_n=256, tile_k=512, whole_k_max=512, vmem_cap=vmem_cap)


def prepare_glu_params(w, b, *, weight_dtype=jnp.bfloat16):
    """One-time parameter prep (hoisted out of the per-call path).

    w: (2*out, in) in PyTorch nn.Linear layout; b: (2*out,).
    Returns (w_left, w_right) as lane-padded, transposed bf16 (K_pad, N_pad) and
    (b_left, b_right) as f32 (1, N_pad).
    """
    two_n, k = w.shape
    n = two_n // 2
    n_pad = _round_up(n, _LANE)
    k_pad = _round_up(k, _LANE)

    w_l = jnp.zeros((k_pad, n_pad), weight_dtype).at[:k, :n].set(w[:n, :].T.astype(weight_dtype))
    w_r = jnp.zeros((k_pad, n_pad), weight_dtype).at[:k, :n].set(w[n:, :].T.astype(weight_dtype))
    b_l = jnp.zeros((1, n_pad), jnp.float32).at[0, :n].set(b[:n].astype(jnp.float32))
    b_r = jnp.zeros((1, n_pad), jnp.float32).at[0, :n].set(b[n:].astype(jnp.float32))
    return w_l, w_r, b_l, b_r


# ---------------------------------------------------------------------------
# Kernels
# ---------------------------------------------------------------------------

def _glu_kernel_single_k(x_ref, wl_ref, wr_ref, bl_ref, br_ref, o_ref):
    """grid = (N tiles [parallel], M tiles [parallel]); whole K in one step.

    No scratch accumulator: z is computed as a value and written directly.
    """
    x = x_ref[...]
    left = jnp.dot(x, wl_ref[...], preferred_element_type=jnp.float32) + bl_ref[...]
    right = jnp.dot(x, wr_ref[...], preferred_element_type=jnp.float32) + br_ref[...]
    o_ref[...] = (left * jax.nn.sigmoid(right)).astype(o_ref.dtype)


def _glu_kernel_k_tiled(x_ref, wl_ref, wr_ref, bl_ref, br_ref, o_ref,
                        accl_ref, accr_ref):
    """grid = (N tiles [parallel], M tiles [parallel], K slabs [arbitrary]).

    Output tile and f32 accumulators stay resident across the K axis.  Note that
    with K tiled the weight blocks are re-streamed once per M tile (the K index
    rolls over between M tiles) — accounted for in the cost estimate.
    """
    kk = pl.program_id(2)

    @pl.when(kk == 0)
    def _():
        accl_ref[...] = jnp.zeros_like(accl_ref)
        accr_ref[...] = jnp.zeros_like(accr_ref)

    x = x_ref[...]
    accl_ref[...] += jnp.dot(x, wl_ref[...], preferred_element_type=jnp.float32)
    accr_ref[...] += jnp.dot(x, wr_ref[...], preferred_element_type=jnp.float32)

    @pl.when(kk == pl.num_programs(2) - 1)
    def _():
        left = accl_ref[...] + bl_ref[...]
        right = accr_ref[...] + br_ref[...]
        o_ref[...] = (left * jax.nn.sigmoid(right)).astype(o_ref.dtype)


# ---------------------------------------------------------------------------
# Wrapper
# ---------------------------------------------------------------------------

def glu_forward(x, w_left, w_right, b_left, b_right, output_dim,
                *, tile_m=None, tile_n=None, tile_k=None, whole_k_max=None):
    """x: [..., input_dim]; (w_left, w_right, b_left, b_right) from prepare_glu_params."""
    *lead, k = x.shape
    k_pad, n_pad = w_left.shape
    m = math.prod(lead) if lead else 1
    out_dtype = x.dtype

    cfg = _device_config()

    # --- tile selection (generation-aware, override-able) ---
    if whole_k_max is None:
        whole_k_max = cfg["whole_k_max"]
    if tile_m is None:
        tile_m = cfg["tile_m"]
        # Raise weight-stream arithmetic intensity for large M (non-v5e, big VMEM).
        if m >= 4 * tile_m and cfg["vmem_cap"] > (64 << 20):
            tile_m *= 2
    tile_m = min(tile_m, _round_up(m, 16))           # bf16 sublane-friendly
    if tile_n is None:
        tile_n = cfg["tile_n"]
    tile_n = _largest_divisor_tile(n_pad, tile_n)

    if tile_k is None and k_pad <= whole_k_max:
        tile_k, k_tiles = k_pad, 1                    # whole-K resident, no accumulator
    else:
        tile_k = _largest_divisor_tile(k_pad, cfg["tile_k"] if tile_k is None else tile_k)
        k_tiles = k_pad // tile_k

    grid_m = pl.cdiv(m, tile_m)                       # no M padding copy of x
    grid_n = n_pad // tile_n

    # --- activations: only K is zero-padded (needed for the reduction); cast to bf16 ---
    x2d = x.reshape(m, k)
    if k_pad != k:
        x2d = jnp.pad(x2d, ((0, 0), (0, k_pad - k)))
    x2d = x2d.astype(jnp.bfloat16)

    # --- specs / kernel selection ---
    if k_tiles == 1:
        grid = (grid_n, grid_m)
        kernel = _glu_kernel_single_k
        in_specs = [
            pl.BlockSpec((tile_m, k_pad), lambda j, i: (i, 0)),
            pl.BlockSpec((k_pad, tile_n), lambda j, i: (0, j)),
            pl.BlockSpec((k_pad, tile_n), lambda j, i: (0, j)),
            pl.BlockSpec((1, tile_n), lambda j, i: (0, j)),
            pl.BlockSpec((1, tile_n), lambda j, i: (0, j)),
        ]
        out_spec = pl.BlockSpec((tile_m, tile_n), lambda j, i: (i, j))
        scratch = []
        dims = ("parallel", "parallel")
    else:
        grid = (grid_n, grid_m, k_tiles)
        kernel = _glu_kernel_k_tiled
        in_specs = [
            pl.BlockSpec((tile_m, tile_k), lambda j, i, kk: (i, kk)),
            pl.BlockSpec((tile_k, tile_n), lambda j, i, kk: (kk, j)),
            pl.BlockSpec((tile_k, tile_n), lambda j, i, kk: (kk, j)),
            pl.BlockSpec((1, tile_n), lambda j, i, kk: (0, j)),
            pl.BlockSpec((1, tile_n), lambda j, i, kk: (0, j)),
        ]
        out_spec = pl.BlockSpec((tile_m, tile_n), lambda j, i, kk: (i, j))
        scratch = [pltpu.VMEM((tile_m, tile_n), jnp.float32),
                   pltpu.VMEM((tile_m, tile_n), jnp.float32)]
        dims = ("parallel", "parallel", "arbitrary")

    # --- VMEM budget from actual block sizes (double-buffered) + headroom ---
    in_item = 2                                   # bf16
    out_item = jnp.dtype(out_dtype).itemsize
    x_blk = tile_m * tile_k * in_item
    w_blk = tile_k * tile_n * in_item
    b_blk = 8 * tile_n * 4                        # (1, tile_n) pads to 8 sublanes
    o_blk = tile_m * tile_n * out_item
    acc_bytes = (2 * tile_m * tile_n * 4) if k_tiles > 1 else 0
    needed = 2 * (x_blk + 2 * w_blk + 2 * b_blk + o_blk) + acc_bytes
    vmem_limit = max(32 << 20, int(needed * 1.25) + (2 << 20))
    vmem_limit = min(vmem_limit, max(cfg["vmem_cap"] - (4 << 20), needed + (2 << 20)))

    # --- truthful cost estimate (W re-fetched per M tile when K is tiled) ---
    x_bytes = m * k_pad * in_item
    w_bytes = 2 * k_pad * n_pad * in_item
    b_bytes = 2 * n_pad * 4
    o_bytes = m * n_pad * out_item
    w_refetch = grid_m if k_tiles > 1 else 1
    cost = pl.CostEstimate(
        flops=2 * m * k_pad * (2 * n_pad),
        transcendentals=m * n_pad,
        bytes_accessed=x_bytes * grid_n + w_bytes * w_refetch + b_bytes + o_bytes,
    )

    out2d = pl.pallas_call(
        kernel,
        out_shape=jax.ShapeDtypeStruct((m, n_pad), out_dtype),
        grid_spec=pltpu.PrefetchScalarGridSpec(
            num_scalar_prefetch=0,
            grid=grid,
            in_specs=in_specs,
            out_specs=out_spec,
            scratch_shapes=scratch,
        ),
        compiler_params=pltpu.CompilerParams(
            dimension_semantics=dims,
            vmem_limit_bytes=int(vmem_limit),
        ),
        cost_estimate=cost,
    )(x2d, w_left, w_right, b_left, b_right)

    out = out2d if n_pad == output_dim else out2d[:, :output_dim]
    return out.reshape(*lead, output_dim)


# ---------------------------------------------------------------------------
# Self-test
# ---------------------------------------------------------------------------

def _run_case(key, batch, seq, input_dim, output_dim, **tile_overrides):
    kx, kw, kb = jax.random.split(key, 3)
    x = jax.random.normal(kx, (batch, seq, input_dim), dtype=jnp.float32)

    # Deterministic init mimicking nn.Linear default (uniform +-1/sqrt(fan_in)).
    bound = 1.0 / jnp.sqrt(jnp.float32(input_dim))
    w = jax.random.uniform(kw, (2 * output_dim, input_dim),
                           minval=-bound, maxval=bound, dtype=jnp.float32)
    b = jax.random.uniform(kb, (2 * output_dim,),
                           minval=-bound, maxval=bound, dtype=jnp.float32)

    params = prepare_glu_params(w, b)  # one-time prep, hoisted out of the call path
    glu = jax.jit(functools.partial(glu_forward, output_dim=output_dim, **tile_overrides))
    out = glu(x, *params)
    jax.block_until_ready(out)

    # Pure-JAX f32 reference (bf16 MXU inputs + f32 accumulation -> loosened tolerance).
    gate = x @ w.T + b
    left, right = gate[..., :output_dim], gate[..., output_dim:]
    ref = left * jax.nn.sigmoid(right)
    assert out.shape == ref.shape, (out.shape, ref.shape)
    err = float(jnp.max(jnp.abs(out - ref)))
    assert jnp.allclose(out, ref, atol=2e-2, rtol=2e-2), f"max abs err {err}"
    return out


if __name__ == "__main__":
    key = jax.random.PRNGKey(0)
    k1, k2 = jax.random.split(key)

    # Case 1: small shapes from the module spec (single-K-step, scratch-free kernel).
    _run_case(k1, batch=2, seq=8, input_dim=32, output_dim=32)

    # Case 2: exercises the N/M/K-tiled accumulator path (forced small tiles).
    _run_case(k2, batch=2, seq=32, input_dim=512, output_dim=256,
              tile_m=32, tile_n=128, tile_k=128, whole_k_max=0)

    print("KERNEL_OK")
</pallas_src>

<mosaic_0001>
module attributes {stable_mosaic.version = 11 : i64} {
  func.func @_glu_kernel_single_k(%arg0: i32, %arg1: i32, %arg2: memref<16x128xbf16, #tpu.memory_space<vmem>>, %arg3: memref<128x128xbf16, #tpu.memory_space<vmem>>, %arg4: memref<128x128xbf16, #tpu.memory_space<vmem>>, %arg5: memref<1x128xf32, #tpu.memory_space<vmem>>, %arg6: memref<1x128xf32, #tpu.memory_space<vmem>>, %arg7: memref<16x128xf32, #tpu.memory_space<vmem>>) attributes {dimension_semantics = [#tpu.dimension_semantics<parallel>, #tpu.dimension_semantics<parallel>], iteration_bounds = array<i64: 1, 1>, scalar_prefetch = 0 : i64, scratch_operands = 0 : i64, tpu.core_type = #tpu.core_type<tc>, window_params = [{transform_indices = @transform_0, window_bounds = array<i64: 16, 128>}, {transform_indices = @transform_1, window_bounds = array<i64: 128, 128>}, {transform_indices = @transform_2, window_bounds = array<i64: 128, 128>}, {transform_indices = @transform_3, window_bounds = array<i64: 1, 128>}, {transform_indices = @transform_4, window_bounds = array<i64: 1, 128>}, {transform_indices = @transform_5, window_bounds = array<i64: 16, 128>}]} {
    %c0 = arith.constant 0 : index
    %c0_0 = arith.constant 0 : index
    %0 = vector.load %arg2[%c0, %c0_0] : memref<16x128xbf16, #tpu.memory_space<vmem>>, vector<16x128xbf16>
    %c0_1 = arith.constant 0 : index
    %c0_2 = arith.constant 0 : index
    %1 = vector.load %arg3[%c0_1, %c0_2] : memref<128x128xbf16, #tpu.memory_space<vmem>>, vector<128x128xbf16>
    %cst = arith.constant dense<0.000000e+00> : vector<16x128xf32>
    %2 = tpu.matmul %0, %1, %cst {dimension_numbers = #tpu.dot_dimension_numbers<[1], [0], [0], [1], [0, 0, 1, 1], [], []>} : vector<16x128xbf16>, vector<128x128xbf16>, vector<16x128xf32> -> vector<16x128xf32>
    %c0_3 = arith.constant 0 : index
    %c0_4 = arith.constant 0 : index
    %3 = vector.load %arg5[%c0_3, %c0_4] : memref<1x128xf32, #tpu.memory_space<vmem>>, vector<1x128xf32>
    %4 = vector.broadcast %3 : vector<1x128xf32> to vector<16x128xf32>
    %5 = arith.addf %2, %4 : vector<16x128xf32>
    %c0_5 = arith.constant 0 : index
    %c0_6 = arith.constant 0 : index
    %6 = vector.load %arg4[%c0_5, %c0_6] : memref<128x128xbf16, #tpu.memory_space<vmem>>, vector<128x128xbf16>
    %cst_7 = arith.constant dense<0.000000e+00> : vector<16x128xf32>
    %7 = tpu.matmul %0, %6, %cst_7 {dimension_numbers = #tpu.dot_dimension_numbers<[1], [0], [0], [1], [0, 0, 1, 1], [], []>} : vector<16x128xbf16>, vector<128x128xbf16>, vector<16x128xf32> -> vector<16x128xf32>
    %c0_8 = arith.constant 0 : index
    %c0_9 = arith.constant 0 : index
    %8 = vector.load %arg6[%c0_8, %c0_9] : memref<1x128xf32, #tpu.memory_space<vmem>>, vector<1x128xf32>
    %9 = vector.broadcast %8 : vector<1x128xf32> to vector<16x128xf32>
    %10 = arith.addf %7, %9 : vector<16x128xf32>
    %11 = arith.negf %10 : vector<16x128xf32>
    %12 = math.exp %11 : vector<16x128xf32>
    %cst_10 = arith.constant 1.000000e+00 : f32
    %13 = vector.broadcast %cst_10 : f32 to vector<16x128xf32>
    %14 = arith.addf %13, %12 : vector<16x128xf32>
    %15 = arith.divf %13, %14 : vector<16x128xf32>
    %16 = arith.mulf %5, %15 : vector<16x128xf32>
    %c0_11 = arith.constant 0 : index
    %c0_12 = arith.constant 0 : index
    %17 = vector.load %arg7[%c0_11, %c0_12] : memref<16x128xf32, #tpu.memory_space<vmem>>, vector<16x128xf32>
    tpu.vector_store %arg7[%c0_11, %c0_12], %16 {strides = array<i32>} : memref<16x128xf32, #tpu.memory_space<vmem>>, vector<16x128xf32>,
    return
  }
  func.func @transform_0(%arg0: i32, %arg1: i32) -> (i32, i32) {
    %c0_i32 = arith.constant 0 : i32
    %c0_i32_0 = arith.constant 0 : i32
    return %arg1, %c0_i32 : i32, i32
  }
  func.func @transform_1(%arg0: i32, %arg1: i32) -> (i32, i32) {
    %c0_i32 = arith.constant 0 : i32
    %c0_i32_0 = arith.constant 0 : i32
    return %c0_i32, %arg0 : i32, i32
  }
  func.func @transform_2(%arg0: i32, %arg1: i32) -> (i32, i32) {
    %c0_i32 = arith.constant 0 : i32
    %c0_i32_0 = arith.constant 0 : i32
    return %c0_i32, %arg0 : i32, i32
  }
  func.func @transform_3(%arg0: i32, %arg1: i32) -> (i32, i32) {
    %c0_i32 = arith.constant 0 : i32
    %c0_i32_0 = arith.constant 0 : i32
    return %c0_i32, %arg0 : i32, i32
  }
  func.func @transform_4(%arg0: i32, %arg1: i32) -> (i32, i32) {
    %c0_i32 = arith.constant 0 : i32
    %c0_i32_0 = arith.constant 0 : i32
    return %c0_i32, %arg0 : i32, i32
  }
  func.func @transform_5(%arg0: i32, %arg1: i32) -> (i32, i32) {
    %c0_i32 = arith.constant 0 : i32
    return %arg1, %arg0 : i32, i32
  }
}

</mosaic_0001>

<llo_original>
// kernel: glu_forward.1
$region0: #{glu_forward.1}
  #allocation0 [shape = 'u32[]', space=smem, size = 0x4, offset = 0x4, fixed_abs, tag = 'smem constant byte address 0x4 - core index']
  #allocation1 [shape = 'u32[144,128]{1,0:T(1,128)}', space=vmem, size = 0x12000, scoped, tag = 'internal scratch']
  %s0 = inlined_call_operand.vmem [shape: bf16[16,128], index: 0, kind: input, shape index: {}]
  %s1 = inlined_call_operand.hbm [shape: bf16[128,128], index: 1, kind: input, shape index: {}]
  %s2 = inlined_call_operand.hbm [shape: bf16[128,128], index: 2, kind: input, shape index: {}]
  %s3 = inlined_call_operand.vmem [shape: f32[1,128], index: 3, kind: input, shape index: {}]
  %s4 = inlined_call_operand.vmem [shape: f32[1,128], index: 4, kind: input, shape index: {}]
  %s5 = inlined_call_operand.vmem [shape: f32[16,128], index: 5, kind: output, shape index: {}]
  %s6 = sld [smem:[#allocation0]]
  $region38: #{glu_forward.1} parent=0
    _
  %s8 = ssub.s32 1, %s6
  %s9 = scalar_select 0, %s8, %s6
  $region1: #{glu_forward.1} parent=0
    #allocation2 [shape = 'u8[32768]{0}', space=vmem, size = 0x8000, scoped, tag = 'input window, operand 1, single buffered']
    #allocation3 [shape = 's32[1]{0}', space=sflag, size = 0x4, scoped, tag = 'scoped memory for glu_forward.1']
    #allocation4 [shape = 'u8[32768]{0}', space=vmem, size = 0x8000, scoped, tag = 'input window, operand 2, single buffered']
    #allocation5 [shape = 's32[1]{0}', space=sflag, size = 0x4, scoped, tag = 'scoped memory for glu_forward.1']
    %10 = vsyncpa [#allocation3], 0
    %11 = vsyncpa [#allocation5], 0
    // Predicated region
    $region2: #{glu_forward.1} parent=1 // pred_check
      _
    $region3: #{glu_forward.1} parent=1 // pred_check_branch
      %13 = sbr.rel (0) target = $region5
    $region4: #{glu_forward.1} parent=1 // pred_region
      _
    $region5: #{glu_forward.1} parent=1 // pred_fallthru
      _
    // Predicated region
    $region6: #{glu_forward.1} parent=1 // pred_check
      _
    $region7: #{glu_forward.1} parent=1 // pred_check_branch
      %15 = sbr.rel (0) target = $region9
    $region8: #{glu_forward.1} parent=1 // pred_region
      %s17 = ssub.s32 1024, 1024
      %18 = vsyncadd [#allocation3], %s17
      %s19 = sshll.u32 [#allocation2], 4
      %s20 = int_to_ptr.vmem [resolvable:$true] %s19
      %25 = dma.hbm_to_vmem [thread:$0]  %s1, 1024, %s20, [#allocation3], 64, 64, 4
    $region9: #{glu_forward.1} parent=1 // pred_fallthru
      _
    // Predicated region
    $region10: #{glu_forward.1} parent=1 // pred_check
      _
    $region11: #{glu_forward.1} parent=1 // pred_check_branch
      %27 = sbr.rel (0) target = $region13
    $region12: #{glu_forward.1} parent=1 // pred_region
      %s29 = ssub.s32 1024, 1024
      %30 = vsyncadd [#allocation5], %s29
      %s31 = sshll.u32 [#allocation4], 4
      %s32 = int_to_ptr.vmem [resolvable:$true] %s31
      %37 = dma.hbm_to_vmem [thread:$0]  %s2, 1024, %s32, [#allocation5], 64, 64, 4
    $region13: #{glu_forward.1} parent=1 // pred_fallthru
      _
    // Predicated region
    $region14: #{glu_forward.1} parent=1 // pred_check
      _
    $region15: #{glu_forward.1} parent=1 // pred_check_branch
      %39 = sbr.rel (0) target = $region17
    $region16: #{glu_forward.1} parent=1 // pred_region
      _
    $region17: #{glu_forward.1} parent=1 // pred_fallthru
      _
    // Predicated region
    $region18: #{glu_forward.1} parent=1 // pred_check
      _
    $region19: #{glu_forward.1} parent=1 // pred_check_branch
      %41 = sbr.rel (0) target = $region21
    $region20: #{glu_forward.1} parent=1 // pred_region
      _
    $region21: #{glu_forward.1} parent=1 // pred_fallthru
      _
    // Predicated region
    $region22: #{glu_forward.1} parent=1 // pred_check
      _
    $region23: #{glu_forward.1} parent=1 // pred_check_branch
      %43 = sbr.rel (0) target = $region25
    $region24: #{glu_forward.1} parent=1 // pred_region
      %44 = dma.done [#allocation3], 1024
    $region25: #{glu_forward.1} parent=1 // pred_fallthru
      _
    // Predicated region
    $region26: #{glu_forward.1} parent=1 // pred_check
      _
    $region27: #{glu_forward.1} parent=1 // pred_check_branch
      %46 = sbr.rel (0) target = $region29
    $region28: #{glu_forward.1} parent=1 // pred_region
      %47 = dma.done [#allocation5], 1024
    $region29: #{glu_forward.1} parent=1 // pred_fallthru
      _
    %v49 = vld [vmem:[%s0] sm:$0xf]
    %v50 = vld [vmem:[%s0 + $0x4] sm:$0xf]
    %v51 = vld [vmem:[#allocation2] sm:$0xf]
    %v52 = vld [vmem:[#allocation2 + $0x4] sm:$0xf]
    %v53 = vld [vmem:[#allocation2 + $0x8] sm:$0xf]
    %v54 = vld [vmem:[#allocation2 + $0xc] sm:$0xf]
    %v55 = vld [vmem:[#allocation2 + $0x10] sm:$0xf]
    %v56 = vld [vmem:[#allocation2 + $0x14] sm:$0xf]
    %v57 = vld [vmem:[#allocation2 + $0x18] sm:$0xf]
    %v58 = vld [vmem:[#allocation2 + $0x1c] sm:$0xf]
    %v59 = vld [vmem:[#allocation2 + $0x20] sm:$0xf]
    %v60 = vld [vmem:[#allocation2 + $0x24] sm:$0xf]
    %v61 = vld [vmem:[#allocation2 + $0x28] sm:$0xf]
    %v62 = vld [vmem:[#allocation2 + $0x2c] sm:$0xf]
    %v63 = vld [vmem:[#allocation2 + $0x30] sm:$0xf]
    %v64 = vld [vmem:[#allocation2 + $0x34] sm:$0xf]
    %v65 = vld [vmem:[#allocation2 + $0x38] sm:$0xf]
    %v66 = vld [vmem:[#allocation2 + $0x3c] sm:$0xf]
    %v67 = vld [vmem:[%s3] sm:$0x1]
    %v69 = vlaneseq
    %v70 = vshrl.u32 %v69, 7
    %v71 = vsub.s32 0, %v70
    %v72 = vrot.slane %v67, %v71
    %v76 = vunpack.c.l.b16 %v49
    %v77 = vunpack.c.l.b16 %v50
    %v78 = vpack.c.b16 %v77, %v76
    %v96 = vunpack.c.l.b16 %v51
    %v97 = vunpack.c.l.b16 %v52
    %v98 = vunpack.c.l.b16 %v53
    %v99 = vunpack.c.l.b16 %v54
    %v100 = vunpack.c.l.b16 %v55
    %v101 = vunpack.c.l.b16 %v56
    %v102 = vunpack.c.l.b16 %v57
    %v103 = vunpack.c.l.b16 %v58
    %v104 = vunpack.c.l.b16 %v59
    %v105 = vunpack.c.l.b16 %v60
    %v106 = vunpack.c.l.b16 %v61
    %v107 = vunpack.c.l.b16 %v62
    %v108 = vunpack.c.l.b16 %v63
    %v109 = vunpack.c.l.b16 %v64
    %v110 = vunpack.c.l.b16 %v65
    %v111 = vunpack.c.l.b16 %v66
    %v112 = vpack.c.b16 %v97, %v96
    %v113 = vpack.c.b16 %v99, %v98
    %v114 = vpack.c.b16 %v101, %v100
    %v115 = vpack.c.b16 %v103, %v102
    %v116 = vpack.c.b16 %v105, %v104
    %v117 = vpack.c.b16 %v107, %v106
    %v118 = vpack.c.b16 %v109, %v108
    %v119 = vpack.c.b16 %v111, %v110
    %128 = vmatprep.subr.bf16.mxu0 0
    %129 = vmatpush1.bf16.msra.mxu0 %v112
    %130 = vmatprep.subr.bf16.mxu0 0
    %131 = vmatpush1.bf16.msra.mxu0 %v113
    %132 = vmatprep.subr.bf16.mxu0 0
    %133 = vmatpush1.bf16.msra.mxu0 %v114
    %134 = vmatprep.subr.bf16.mxu0 0
    %135 = vmatpush1.bf16.msra.mxu0 %v115
    %136 = vmatprep.subr.bf16.mxu0 0
    %137 = vmatpush1.bf16.msra.mxu0 %v116
    %138 = vmatprep.subr.bf16.mxu0 0
    %139 = vmatpush1.bf16.msra.mxu0 %v117
    %140 = vmatprep.subr.bf16.mxu0 0
    %141 = vmatpush1.bf16.msra.mxu0 %v118
    %142 = vmatprep.subr.bf16.mxu0 0
    %143 = vmatpush1.bf16.msra.mxu0 %v119
    %144 = vmatprep.subr.bf16.mxu0 0
    %145 = vmatpush1.bf16.msra.mxu0 0
    %146 = vmatprep.subr.bf16.mxu0 0
    %147 = vmatpush1.bf16.msra.mxu0 0
    %148 = vmatprep.subr.bf16.mxu0 0
    %149 = vmatpush1.bf16.msra.mxu0 0
    %150 = vmatprep.subr.bf16.mxu0 0
    %151 = vmatpush1.bf16.msra.mxu0 0
    %152 = vmatprep.subr.bf16.mxu0 0
    %153 = vmatpush1.bf16.msra.mxu0 0
    %154 = vmatprep.subr.bf16.mxu0 0
    %155 = vmatpush1.bf16.msra.mxu0 0
    %156 = vmatprep.subr.bf16.mxu0 0
    %157 = vmatpush1.bf16.msra.mxu0 0
    %158 = vmatprep.subr.bf16.mxu0 0
    %159 = vmatpush1.bf16.msra.mxu0 0
    %160 = vmatprep.mubr.bf16.mxu0 0
    %161 = vmatmul.mubr.bf16.gmra.mrb[0].mxu0 %v78
    %v162 = vpop.f32.mrb[0].mxu0
    %v163 = vadd.f32 %v72, %v162
    %v164 = vpop.f32.mrb[0].mxu0
    %v165 = vpop.f32.mrb[0].mxu0
    %v166 = vadd.f32 %v72, %v165
    %v167 = vpop.f32.mrb[0].mxu0
    %168 = vdwg.mxu0
    %v169 = vld [vmem:[#allocation4] sm:$0xf]
    %v170 = vld [vmem:[#allocation4 + $0x4] sm:$0xf]
    %v171 = vld [vmem:[#allocation4 + $0x8] sm:$0xf]
    %v172 = vld [vmem:[#allocation4 + $0xc] sm:$0xf]
    %v173 = vld [vmem:[#allocation4 + $0x10] sm:$0xf]
    %v174 = vld [vmem:[#allocation4 + $0x14] sm:$0xf]
    %v175 = vld [vmem:[#allocation4 + $0x18] sm:$0xf]
    %v176 = vld [vmem:[#allocation4 + $0x1c] sm:$0xf]
    %v177 = vld [vmem:[#allocation4 + $0x20] sm:$0xf]
    %v178 = vld [vmem:[#allocation4 + $0x24] sm:$0xf]
    %v179 = vld [vmem:[#allocation4 + $0x28] sm:$0xf]
    %v180 = vld [vmem:[#allocation4 + $0x2c] sm:$0xf]
    %v181 = vld [vmem:[#allocation4 + $0x30] sm:$0xf]
    %v182 = vld [vmem:[#allocation4 + $0x34] sm:$0xf]
    %v183 = vld [vmem:[#allocation4 + $0x38] sm:$0xf]
    %v184 = vld [vmem:[#allocation4 + $0x3c] sm:$0xf]
    %v185 = vld [vmem:[%s4] sm:$0x1]
    %v187 = vlaneseq
    %v188 = vshrl.u32 %v187, 7
    %v189 = vsub.s32 0, %v188
    %v190 = vrot.slane %v185, %v189
    %v208 = vunpack.c.l.b16 %v169
    %v209 = vunpack.c.l.b16 %v170
    %v210 = vunpack.c.l.b16 %v171
    %v211 = vunpack.c.l.b16 %v172
    %v212 = vunpack.c.l.b16 %v173
    %v213 = vunpack.c.l.b16 %v174
    %v214 = vunpack.c.l.b16 %v175
    %v215 = vunpack.c.l.b16 %v176
    %v216 = vunpack.c.l.b16 %v177
    %v217 = vunpack.c.l.b16 %v178
    %v218 = vunpack.c.l.b16 %v179
    %v219 = vunpack.c.l.b16 %v180
    %v220 = vunpack.c.l.b16 %v181
    %v221 = vunpack.c.l.b16 %v182
    %v222 = vunpack.c.l.b16 %v183
    %v223 = vunpack.c.l.b16 %v184
    %v224 = vpack.c.b16 %v209, %v208
    %v225 = vpack.c.b16 %v211, %v210
    %v226 = vpack.c.b16 %v213, %v212
    %v227 = vpack.c.b16 %v215, %v214
    %v228 = vpack.c.b16 %v217, %v216
    %v229 = vpack.c.b16 %v219, %v218
    %v230 = vpack.c.b16 %v221, %v220
    %v231 = vpack.c.b16 %v223, %v222
    %240 = vmatprep.subr.bf16.mxu0 0
    %241 = vmatpush1.bf16.msra.mxu0 %v224
    %242 = vmatprep.subr.bf16.mxu0 0
    %243 = vmatpush1.bf16.msra.mxu0 %v225
    %244 = vmatprep.subr.bf16.mxu0 0
    %245 = vmatpush1.bf16.msra.mxu0 %v226
    %246 = vmatprep.subr.bf16.mxu0 0
    %247 = vmatpush1.bf16.msra.mxu0 %v227
    %248 = vmatprep.subr.bf16.mxu0 0
    %249 = vmatpush1.bf16.msra.mxu0 %v228
    %250 = vmatprep.subr.bf16.mxu0 0
    %251 = vmatpush1.bf16.msra.mxu0 %v229
    %252 = vmatprep.subr.bf16.mxu0 0
    %253 = vmatpush1.bf16.msra.mxu0 %v230
    %254 = vmatprep.subr.bf16.mxu0 0
    %255 = vmatpush1.bf16.msra.mxu0 %v231
    %256 = vmatprep.subr.bf16.mxu0 0
    %257 = vmatpush1.bf16.msra.mxu0 0
    %258 = vmatprep.subr.bf16.mxu0 0
    %259 = vmatpush1.bf16.msra.mxu0 0
    %260 = vmatprep.subr.bf16.mxu0 0
    %261 = vmatpush1.bf16.msra.mxu0 0
    %262 = vmatprep.subr.bf16.mxu0 0
    %263 = vmatpush1.bf16.msra.mxu0 0
    %264 = vmatprep.subr.bf16.mxu0 0
    %265 = vmatpush1.bf16.msra.mxu0 0
    %266 = vmatprep.subr.bf16.mxu0 0
    %267 = vmatpush1.bf16.msra.mxu0 0
    %268 = vmatprep.subr.bf16.mxu0 0
    %269 = vmatpush1.bf16.msra.mxu0 0
    %270 = vmatprep.subr.bf16.mxu0 0
    %271 = vmatpush1.bf16.msra.mxu0 0
    %272 = vmatprep.mubr.bf16.mxu0 0
    %273 = vmatmul.mubr.bf16.gmra.mrb[0].mxu0 %v78
    %v274 = vpop.f32.mrb[0].mxu0
    %v275 = vadd.f32 %v190, %v274
    %v276 = vpop.f32.mrb[0].mxu0
    %v277 = vpop.f32.mrb[0].mxu0
    %v278 = vadd.f32 %v190, %v277
    %v279 = vpop.f32.mrb[0].mxu0
    %280 = vdwg.mxu0
    %v281 = vxor.u32 %v275, 2147483648
    %v282 = vxor.u32 %v278, 2147483648
    %v283 = vmul.f32 %v281, 1.442695
    %v284 = vpow.pop %v283
    %v285 = vmul.f32 %v282, 1.442695
    %v286 = vpow.pop %v285
    %v287 = vadd.f32 %v284, 1.0
    %v288 = vadd.f32 %v286, 1.0
    %v289 = vrcp.pop %v287
    %v290 = vmul.f32 1.0, %v289
    %v291 = vrcp.pop %v288
    %v292 = vmul.f32 1.0, %v291
    %v293 = vmul.f32 %v163, %v290
    %v294 = vmul.f32 %v166, %v292
    %295 = vst [vmem:[%s5] sm:$0xff] %v293
    %296 = vst [vmem:[%s5 + $0x8] sm:$0xff] %v294
    // Predicated region
    $region30: #{glu_forward.1} parent=1 // pred_check
      _
    $region31: #{glu_forward.1} parent=1 // pred_check_branch
      %298 = sbr.rel (0) target = $region33
    $region32: #{glu_forward.1} parent=1 // pred_region
      _
    $region33: #{glu_forward.1} parent=1 // pred_fallthru
      _
    // Predicated region
    $region34: #{glu_forward.1} parent=1 // pred_check
      _
    $region35: #{glu_forward.1} parent=1 // pred_check_branch
      %300 = sbr.rel (0) target = $region37
    $region36: #{glu_forward.1} parent=1 // pred_region
      _
    $region37: #{glu_forward.1} parent=1 // pred_fallthru
      _
    %301 = vsyncpa [#allocation3], 1
    %302 = vsyncpa [#allocation5], 1

</llo_original>
